<compile_context>
chip_gen: v6e
topology: v6e:2x2x1
jax: 0.10.0
libtpu: 0.0.40
codegen_flags: <defaults>
</compile_context>

<pallas_src>
import jax
import jax.numpy as jnp
from jax.experimental import pallas as pl
from jax.experimental.pallas import tpu as pltpu


def _round_up(n: int, m: int) -> int:
    return ((n + m - 1) // m) * m


def _pick_block_b(B: int, block_b: int) -> int:
    """Sublane-aligned (multiple-of-8) batch tile for the gridded path.

    Never returns the full B as a fallback (a single giant block for large
    unaligned B could blow the scoped-VMEM budget on v7x); Pallas masks the
    ragged tail tile correctly, so a capped aligned tile is always safe.
    """
    tb = (min(block_b, B) // 8) * 8
    return max(tb, 8)


# ----------------------------------------------------------------------------
# Kernel 1: NoiseEmbedding1 forward  ->  [cos(2*pi*x*w) | sin(2*pi*x*w)]
# (standalone; Model2 integration should prefer the fused kernel below)
# ----------------------------------------------------------------------------
def noise_embedding_kernel(x_ref, w_ref, out_ref):
    # x_ref: (TB, 1)   w_ref: (1, H)   out_ref: (TB, 2*H)
    H = w_ref.shape[1]
    xs = (2.0 * jnp.pi) * x_ref[...]     # scale the skinny (TB, 1) column
    f = xs * w_ref[...]                  # rank-1 outer product, (TB, H)
    # Two direct half-width stores; with H % 128 == 0 both are unmasked
    # full-lane stores (no lane-axis concat / XLU relayout).
    out_ref[:, :H] = jnp.cos(f)
    out_ref[:, H:] = jnp.sin(f)


# ----------------------------------------------------------------------------
# Kernel 2 (model path): fused  relu(noise_fc1(noise_emb(x)))
#   x:    (TB, 1)      f32
#   wemb: (1, Hp)      f32   (zero-padded Fourier weights)
#   w1:   (2*Hp, Cp)   bf16  (= torch Linear weight.T, zero-padded rows/cols)
#   b:    (1, Cp)      f32
#   out:  (TB, Cp)     f32
#   emb:  (TB, 2*Hp)   f32   VMEM scratch used to stage [cos | sin]
# ----------------------------------------------------------------------------
def fused_cond_kernel(x_ref, wemb_ref, w1_ref, b_ref, out_ref, emb_ref):
    H = wemb_ref.shape[1]
    f = ((2.0 * jnp.pi) * x_ref[...]) * wemb_ref[...]        # (TB, H) f32
    # Stage [cos | sin] with two lane-dense stores into VMEM scratch
    # (H is a multiple of 128 -> no masked vst, no XLU concat).
    emb_ref[:, :H] = jnp.cos(f)
    emb_ref[:, H:] = jnp.sin(f)
    # Single K = 2*H matmul: fills the 256-wide MXU on v6e/v7x in one pass.
    # bf16 operands (native MXU throughput), f32 accumulation.
    y = jnp.dot(emb_ref[...].astype(jnp.bfloat16), w1_ref[...],
                preferred_element_type=jnp.float32)          # (TB, Cp)
    out_ref[...] = jnp.maximum(y + b_ref[...], 0.0)


# ----------------------------------------------------------------------------
# Wrappers
# ----------------------------------------------------------------------------
def noise_embedding(x: jax.Array, weight: jax.Array, *, block_b: int = 1024) -> jax.Array:
    """NoiseEmbedding1.forward: x (B,) f32, weight (1, H) -> (B, 2H) [cos|sin]."""
    assert x.ndim == 1
    assert weight.ndim == 2 and weight.shape[0] == 1
    B = x.shape[0]
    H = weight.shape[1]
    x2d = x.reshape(B, 1).astype(jnp.float32)
    w = weight.astype(jnp.float32)
    out_shape = jax.ShapeDtypeStruct((B, 2 * H), jnp.float32)

    if B <= block_b:
        # Small batch: grid-less call -- one full-extent block, no pipeline
        # machinery, no per-step overhead.
        return pl.pallas_call(noise_embedding_kernel, out_shape=out_shape)(x2d, w)

    TB = _pick_block_b(B, block_b)
    cost = pl.CostEstimate(
        flops=4 * B * H,
        transcendentals=2 * B * H,
        bytes_accessed=4 * (B + H + 2 * B * H),
    )
    return pl.pallas_call(
        noise_embedding_kernel,
        out_shape=out_shape,
        grid=(pl.cdiv(B, TB),),
        in_specs=[
            pl.BlockSpec((TB, 1), lambda i: (i, 0)),
            pl.BlockSpec((1, H), lambda i: (0, 0)),
        ],
        out_specs=pl.BlockSpec((TB, 2 * H), lambda i: (i, 0)),
        compiler_params=pltpu.CompilerParams(dimension_semantics=("parallel",)),
        cost_estimate=cost,
    )(x2d, w)


def noise_embedding_fc1_relu(x: jax.Array, weight: jax.Array, w1: jax.Array,
                             b1: jax.Array, *, block_b: int = 1024) -> jax.Array:
    """Fused relu(fc1([cos|sin](2*pi*x*w))) -- the value Model2 broadcasts.

    x: (B,), weight: (1, H), w1: (2H, C) (= torch Linear weight transposed),
    b1: (C,)  ->  (B, C) f32.
    """
    assert x.ndim == 1
    B = x.shape[0]
    H = weight.shape[1]
    C = w1.shape[1]
    assert w1.shape[0] == 2 * H and b1.shape == (C,)

    # Pad H and C up to multiples of 128 so all stores are lane-dense and the
    # MXU tiles are full.  Zero-padded w1 rows/cols make the padding exact
    # (cos(0)=1 / sin(0)=0 in the padded lanes multiply zero weight rows).
    Hp = _round_up(H, 128)
    Cp = _round_up(C, 128)

    x2d = x.reshape(B, 1).astype(jnp.float32)
    w = jnp.zeros((1, Hp), jnp.float32).at[:, :H].set(weight.astype(jnp.float32))
    w1f = w1.astype(jnp.float32)
    w1p = jnp.zeros((2 * Hp, Cp), jnp.bfloat16)
    w1p = w1p.at[:H, :C].set(w1f[:H].astype(jnp.bfloat16))
    w1p = w1p.at[Hp:Hp + H, :C].set(w1f[H:].astype(jnp.bfloat16))
    b2d = jnp.zeros((1, Cp), jnp.float32).at[:, :C].set(b1.astype(jnp.float32))

    if B <= block_b:
        # Grid-less: whole problem (a few KiB .. a few MiB) lives in VMEM.
        out = pl.pallas_call(
            fused_cond_kernel,
            out_shape=jax.ShapeDtypeStruct((B, Cp), jnp.float32),
            scratch_shapes=[pltpu.VMEM((B, 2 * Hp), jnp.float32)],
        )(x2d, w, w1p, b2d)
    else:
        TB = _pick_block_b(B, block_b)
        cost = pl.CostEstimate(
            flops=4 * B * Hp + 2 * B * (2 * Hp) * Cp,
            transcendentals=2 * B * Hp,
            bytes_accessed=4 * (B + Hp + Cp + B * Cp) + 2 * (2 * Hp * Cp),
        )
        out = pl.pallas_call(
            fused_cond_kernel,
            out_shape=jax.ShapeDtypeStruct((B, Cp), jnp.float32),
            grid=(pl.cdiv(B, TB),),
            in_specs=[
                pl.BlockSpec((TB, 1), lambda i: (i, 0)),
                # Constant-index weight blocks (same tile every grid step); the
                # default second pipeline buffer is dead but negligible here.
                # TODO(synk): single-buffer these via pipeline_mode once the
                # Buffered(1) path is confirmed on the target jax version.
                pl.BlockSpec((1, Hp), lambda i: (0, 0)),
                pl.BlockSpec((2 * Hp, Cp), lambda i: (0, 0)),
                pl.BlockSpec((1, Cp), lambda i: (0, 0)),
            ],
            out_specs=pl.BlockSpec((TB, Cp), lambda i: (i, 0)),
            scratch_shapes=[pltpu.VMEM((TB, 2 * Hp), jnp.float32)],
            compiler_params=pltpu.CompilerParams(
                dimension_semantics=("parallel",)),
            cost_estimate=cost,
        )(x2d, w, w1p, b2d)

    if Cp != C:
        out = out[:, :C]
    return out


if __name__ == "__main__":
    key = jax.random.PRNGKey(0)
    k_x, k_w, k_w1, k_b1, k_xl = jax.random.split(key, 5)

    cond_channels = 256   # H = 128 -> lane-dense half stores
    nb_channels = 128     # C multiple of 128 -> lane-dense fused output
    batch = 16            # small batch -> grid-less path

    H = cond_channels // 2
    weight = jax.random.normal(k_w, (1, H), dtype=jnp.float32)
    x = jax.random.normal(k_x, (batch,), dtype=jnp.float32)
    w1 = jax.random.normal(k_w1, (cond_channels, nb_channels), dtype=jnp.float32)
    w1 = w1 * (1.0 / jnp.sqrt(jnp.float32(cond_channels)))
    b1 = 0.01 * jax.random.normal(k_b1, (nb_channels,), dtype=jnp.float32)

    # --- NoiseEmbedding1 forward (standalone, grid-less at this size) ---
    emb = jax.block_until_ready(noise_embedding(x, weight))
    f_ref = 2.0 * jnp.pi * x[:, None] * weight
    emb_ref = jnp.concatenate([jnp.cos(f_ref), jnp.sin(f_ref)], axis=-1)
    assert emb.shape == (batch, cond_channels)
    assert jnp.allclose(emb, emb_ref, atol=1e-3, rtol=1e-3)

    # --- fused relu(noise_fc1(noise_emb(x))): the value Model2 broadcasts into
    #     its residual blocks (no (B, 2H) HBM intermediate, single K=256 dot) ---
    cond = jax.block_until_ready(noise_embedding_fc1_relu(x, weight, w1, b1))
    fused_ref = jnp.maximum(emb_ref @ w1 + b1, 0.0)
    assert cond.shape == (batch, nb_channels)
    assert jnp.allclose(cond, fused_ref, atol=5e-2, rtol=5e-2)

    # --- exercise the gridded (large-batch) path once: TB=1024 tiles, 2 grid
    #     steps -> pipelined HBM traffic, megacore-shardable on v7x ---
    big_b = 2048
    x_big = jax.random.normal(k_xl, (big_b,), dtype=jnp.float32)
    cond_big = jax.block_until_ready(
        noise_embedding_fc1_relu(x_big, weight, w1, b1))
    f_big = 2.0 * jnp.pi * x_big[:, None] * weight
    emb_big = jnp.concatenate([jnp.cos(f_big), jnp.sin(f_big)], axis=-1)
    ref_big = jnp.maximum(emb_big @ w1 + b1, 0.0)
    assert cond_big.shape == (big_b, nb_channels)
    assert jnp.allclose(cond_big, ref_big, atol=5e-2, rtol=5e-2)

    print("KERNEL_OK")
</pallas_src>

<mosaic_0001>
module attributes {stable_mosaic.version = 11 : i64} {
  func.func @noise_embedding_kernel(%arg0: memref<16x1xf32, #tpu.memory_space<vmem>>, %arg1: memref<1x128xf32, #tpu.memory_space<vmem>>, %arg2: memref<16x256xf32, #tpu.memory_space<vmem>>) attributes {dimension_semantics = [], scalar_prefetch = 0 : i64, scratch_operands = 0 : i64, tpu.core_type = #tpu.core_type<tc>} {
    %c0 = arith.constant 0 : index
    %c0_0 = arith.constant 0 : index
    %0 = vector.load %arg0[%c0, %c0_0] : memref<16x1xf32, #tpu.memory_space<vmem>>, vector<16x1xf32>
    %cst = arith.constant 6.28318548 : f32
    %1 = vector.broadcast %cst : f32 to vector<16x1xf32>
    %2 = arith.mulf %1, %0 : vector<16x1xf32>
    %c0_1 = arith.constant 0 : index
    %c0_2 = arith.constant 0 : index
    %3 = vector.load %arg1[%c0_1, %c0_2] : memref<1x128xf32, #tpu.memory_space<vmem>>, vector<1x128xf32>
    %4 = vector.broadcast %2 : vector<16x1xf32> to vector<16x128xf32>
    %5 = vector.broadcast %3 : vector<1x128xf32> to vector<16x128xf32>
    %6 = arith.mulf %4, %5 : vector<16x128xf32>
    %7 = math.cos %6 : vector<16x128xf32>
    %c0_3 = arith.constant 0 : index
    %c0_4 = arith.constant 0 : index
    %8 = vector.load %arg2[%c0_3, %c0_4] : memref<16x256xf32, #tpu.memory_space<vmem>>, vector<16x128xf32>
    tpu.vector_store %arg2[%c0_3, %c0_4], %7 {strides = array<i32>} : memref<16x256xf32, #tpu.memory_space<vmem>>, vector<16x128xf32>,
    %9 = math.sin %6 : vector<16x128xf32>
    %c0_5 = arith.constant 0 : index
    %c128 = arith.constant 128 : index
    %10 = vector.load %arg2[%c0_5, %c128] : memref<16x256xf32, #tpu.memory_space<vmem>>, vector<16x128xf32>
    tpu.vector_store %arg2[%c0_5, %c128], %9 {strides = array<i32>} : memref<16x256xf32, #tpu.memory_space<vmem>>, vector<16x128xf32>,
    return
  }
}

</mosaic_0001>

<llo_original>
// kernel: tpu_custom_call.1
$region0: #{tpu_custom_call.1}
  #allocation0 [shape = 'u32[]', space=smem, size = 0x4, offset = 0x4, fixed_abs, tag = 'smem constant byte address 0x4 - core index']
  #allocation1 [shape = 'u32[144,128]{1,0:T(1,128)}', space=vmem, size = 0x12000, scoped, tag = 'internal scratch']
  %s0 = inlined_call_operand.vmem [shape: f32[16,1], index: 0, kind: input, shape index: {}]
  %s1 = inlined_call_operand.vmem [shape: f32[1,128], index: 1, kind: input, shape index: {}]
  %s2 = inlined_call_operand.hbm [shape: f32[16,256], index: 2, kind: output, shape index: {}]
  %s3 = sld [smem:[#allocation0]]
  $region18: #{tpu_custom_call.1} parent=0
    _
  %s5 = ssub.s32 1, %s3
  %s6 = scalar_select 0, %s5, %s3
  $region1: #{tpu_custom_call.1} parent=0
    #allocation2 [shape = 'u8[16384]{0}', space=vmem, size = 0x4000, scoped, tag = 'output window, operand 0, single buffered']
    #allocation3 [shape = 's32[1]{0}', space=sflag, size = 0x4, scoped, tag = 'scoped memory for tpu_custom_call.1']
    %7 = vsyncpa [#allocation3], 0
    // Predicated region
    $region2: #{tpu_custom_call.1} parent=1 // pred_check
      _
    $region3: #{tpu_custom_call.1} parent=1 // pred_check_branch
      %9 = sbr.rel (0) target = $region5
    $region4: #{tpu_custom_call.1} parent=1 // pred_region
      _
    $region5: #{tpu_custom_call.1} parent=1 // pred_fallthru
      _
    // Predicated region
    $region6: #{tpu_custom_call.1} parent=1 // pred_check
      _
    $region7: #{tpu_custom_call.1} parent=1 // pred_check_branch
      %11 = sbr.rel (0) target = $region9
    $region8: #{tpu_custom_call.1} parent=1 // pred_region
      _
    $region9: #{tpu_custom_call.1} parent=1 // pred_fallthru
      _
    %v12 = vld [vmem:[%s0] sm:$0xff]
    %v13 = vld [vmem:[%s0 + $0x8] sm:$0xff]
    %v14 = vmul.f32 %v12, 6.2831855
    %v15 = vmul.f32 %v13, 6.2831855
    %v16 = vld [vmem:[%s1] sm:$0x1]
    %18 = vset.pattern.permute.xlu0 0
    %19 = vperm.xlu0 %18, %v14
    %v20 = vpop.permute.xlu0 %19
    %23 = vset.pattern.permute.xlu0 0
    %24 = vperm.xlu0 %23, %v15
    %v25 = vpop.permute.xlu0 %24
    %v28 = vlaneseq
    %v29 = vshrl.u32 %v28, 7
    %v30 = vsub.s32 0, %v29
    %v31 = vrot.slane %v16, %v30
    %v33 = vmul.f32 %v20, %v31
    %v34 = vmul.f32 %v25, %v31
    %v35 = vand.u32 2147483647, %v33
    %vm36 = vcmp.le.f32.partialorder %v35, 0.7853982
    %vm37 = vcmp.lt.s32.totalorder %v33, 0
    %v38 = vand.u32 %v33, 2139095040
    %v39 = vshrl.u32 %v38, 23
    %v40 = vsub.s32 %v39, 127
    %v41 = vand.u32 2147483647, %v33
    %v42 = vand.u32 %v41, 8388607
    %v43 = vor.u32 %v42, 8388608
    %v44 = vsub.s32 0, %v43
    %v45 = vadd.s32 %v40, 1
    %vm46 = vcmp.gt.s32.totalorder %v45, 0
    %v47 = vsel %vm46, %v45, 0
    %v48 = vshrl.u32 %v47, 5
    %v49 = vand.u32 %v47, 31
    %v50 = vsub.s32 32, %v49
    %v51 = vshrl.u32 683565275, %v50
    %v52 = vshll.u32 683565275, %v49
    %v53 = vshrl.u32 2475754826, %v50
    %v54 = vor.u32 %v52, %v53
    %v55 = vshll.u32 2475754826, %v49
    %v56 = vshrl.u32 2131351028, %v50
    %v57 = vor.u32 %v55, %v56
    %v58 = vshll.u32 2131351028, %v49
    %v59 = vshrl.u32 2102212464, %v50
    %v60 = vor.u32 %v58, %v59
    %v61 = vshll.u32 2102212464, %v49
    %v62 = vshrl.u32 920167782, %v50
    %v63 = vor.u32 %v61, %v62
    %v64 = vshll.u32 920167782, %v49
    %v65 = vshrl.u32 1326507024, %v50
    %v66 = vor.u32 %v64, %v65
    %vm67 = vcmp.lt.s32.totalorder %v48, 1
    %vm68 = vcmp.lt.s32.totalorder %v48, 2
    %vm69 = vcmp.lt.s32.totalorder %v48, 3
    %vm70 = vcmp.lt.s32.totalorder %v48, 4
    %v71 = vsel %vm67, %v51, %v54
    %v72 = vsel %vm70, %v60, 2102212464
    %v73 = vsel %vm69, %v57, %v72
    %v74 = vsel %vm68, %v71, %v73
    %v75 = vsel %vm67, %v54, %v57
    %v76 = vsel %vm70, %v63, 920167782
    %v77 = vsel %vm69, %v60, %v76
    %v78 = vsel %vm68, %v75, %v77
    %v79 = vsel %vm67, %v57, %v60
    %v80 = vsel %vm70, %v66, 1326507024
    %v81 = vsel %vm69, %v63, %v80
    %v82 = vsel %vm68, %v79, %v81
    %v83 = vshll.u32 %v43, 8
    %v84 = vmul.u32.u64.compose %v83, %v82
    %v85 = vextract.low.u32 %v84
    %v86 = vextract.high.u32 %v84
    %v87 = vmul.u32.u64.compose %v83, %v78
    %v88 = vextract.low.u32 %v87
    %v89 = vextract.high.u32 %v87
    %v90 = vmul.u32 %v83, %v74
    %v91 = vadd.s32 %v86, %v88
    %vm92 = vc.u32 %v86, %v88
    %v93 = vadd.s32 %v89, 1
    %v94 = vsel %vm92, %v93, %v89
    %v95 = vadd.s32 %v90, %v94
    %v96 = vadd.s32 %v95, 536870912
    %v97 = vshrl.u32 %v96, 30
    %v98 = vshll.u32 %v97, 30
    %v99 = vsub.s32 %v95, %v98
    %vm100 = vcmp.lt.s32.totalorder %v99, 0
    %v101 = vsub.s32 0, %v99
    %v102 = vsel %vm100, %v101, %v99
    %v103 = vclz %v102
    %v104 = vsub.s32 %v103, 2
    %vm105 = vcmp.gt.s32.totalorder 0, %v104
    %v106 = vsel %vm105, 0, %v104
    %v107 = vsub.s32 32, %v106
    %v108 = vshll.u32 %v99, %v106
    %v109 = vshrl.u32 %v91, %v107
    %v110 = vor.u32 %v108, %v109
    %v111 = vsub.s32 4294967266, %v106
    %v112 = vadd.s32 %v111, 127
    %v113 = vshll.u32 %v112, 23
    %v114 = vor.u32 4788187, %v113
    %v115 = vand.u32 2147483647, %v114
    %v117 = vcvt.s32.f32 %v110
    %v118 = vmul.f32 %v117, %v115
    %v119 = vxor.u32 %v118, 2147483648
    %v120 = vsel %vm37, %v119, %v118
    %v121 = vsub.s32 4, %v97
    %v122 = vsel %vm37, %v121, %v97
    %v123 = vsel %vm36, %v33, %v120
    %v124 = vsel %vm36, 0, %v122
    %v125 = vcosq.f32.pop %v123
    %v126 = vsinq.f32.pop %v123
    %vm127 = vweird.f32 %v33
    %v128 = vand.u32 %v124, 3
    %vm129 = vcmp.lt.s32.totalorder %v128, 2
    %vm130 = vcmp.eq.s32.totalorder %v128, 0
    %v131 = vxor.u32 %v126, 2147483648
    %v132 = vsel %vm130, %v125, %v131
    %vm133 = vcmp.eq.s32.totalorder %v128, 2
    %v134 = vxor.u32 %v125, 2147483648
    %v135 = vsel %vm133, %v134, %v126
    %v136 = vsel %vm129, %v132, %v135
    %v137 = vsel %vm127, nan, %v136
    %v138 = vand.u32 2147483647, %v34
    %vm139 = vcmp.le.f32.partialorder %v138, 0.7853982
    %vm140 = vcmp.lt.s32.totalorder %v34, 0
    %v141 = vand.u32 %v34, 2139095040
    %v142 = vshrl.u32 %v141, 23
    %v143 = vsub.s32 %v142, 127
    %v144 = vand.u32 2147483647, %v34
    %v145 = vand.u32 %v144, 8388607
    %v146 = vor.u32 %v145, 8388608
    %v147 = vsub.s32 0, %v146
    %v148 = vadd.s32 %v143, 1
    %vm149 = vcmp.gt.s32.totalorder %v148, 0
    %v150 = vsel %vm149, %v148, 0
    %v151 = vshrl.u32 %v150, 5
    %v152 = vand.u32 %v150, 31
    %v153 = vsub.s32 32, %v152
    %v154 = vshrl.u32 683565275, %v153
    %v155 = vshll.u32 683565275, %v152
    %v156 = vshrl.u32 2475754826, %v153
    %v157 = vor.u32 %v155, %v156
    %v158 = vshll.u32 2475754826, %v152
    %v159 = vshrl.u32 2131351028, %v153
    %v160 = vor.u32 %v158, %v159
    %v161 = vshll.u32 2131351028, %v152
    %v162 = vshrl.u32 2102212464, %v153
    %v163 = vor.u32 %v161, %v162
    %v164 = vshll.u32 2102212464, %v152
    %v165 = vshrl.u32 920167782, %v153
    %v166 = vor.u32 %v164, %v165
    %v167 = vshll.u32 920167782, %v152
    %v168 = vshrl.u32 1326507024, %v153
    %v169 = vor.u32 %v167, %v168
    %vm170 = vcmp.lt.s32.totalorder %v151, 1
    %vm171 = vcmp.lt.s32.totalorder %v151, 2
    %vm172 = vcmp.lt.s32.totalorder %v151, 3
    %vm173 = vcmp.lt.s32.totalorder %v151, 4
    %v174 = vsel %vm170, %v154, %v157
    %v175 = vsel %vm173, %v163, 2102212464
    %v176 = vsel %vm172, %v160, %v175
    %v177 = vsel %vm171, %v174, %v176
    %v178 = vsel %vm170, %v157, %v160
    %v179 = vsel %vm173, %v166, 920167782
    %v180 = vsel %vm172, %v163, %v179
    %v181 = vsel %vm171, %v178, %v180
    %v182 = vsel %vm170, %v160, %v163
    %v183 = vsel %vm173, %v169, 1326507024
    %v184 = vsel %vm172, %v166, %v183
    %v185 = vsel %vm171, %v182, %v184
    %v186 = vshll.u32 %v146, 8
    %v187 = vmul.u32.u64.compose %v186, %v185
    %v188 = vextract.low.u32 %v187
    %v189 = vextract.high.u32 %v187
    %v190 = vmul.u32.u64.compose %v186, %v181
    %v191 = vextract.low.u32 %v190
    %v192 = vextract.high.u32 %v190
    %v193 = vmul.u32 %v186, %v177
    %v194 = vadd.s32 %v189, %v191
    %vm195 = vc.u32 %v189, %v191
    %v196 = vadd.s32 %v192, 1
    %v197 = vsel %vm195, %v196, %v192
    %v198 = vadd.s32 %v193, %v197
    %v199 = vadd.s32 %v198, 536870912
    %v200 = vshrl.u32 %v199, 30
    %v201 = vshll.u32 %v200, 30
    %v202 = vsub.s32 %v198, %v201
    %vm203 = vcmp.lt.s32.totalorder %v202, 0
    %v204 = vsub.s32 0, %v202
    %v205 = vsel %vm203, %v204, %v202
    %v206 = vclz %v205
    %v207 = vsub.s32 %v206, 2
    %vm208 = vcmp.gt.s32.totalorder 0, %v207
    %v209 = vsel %vm208, 0, %v207
    %v210 = vsub.s32 32, %v209
    %v211 = vshll.u32 %v202, %v209
    %v212 = vshrl.u32 %v194, %v210
    %v213 = vor.u32 %v211, %v212
    %v214 = vsub.s32 4294967266, %v209
    %v215 = vadd.s32 %v214, 127
    %v216 = vshll.u32 %v215, 23
    %v217 = vor.u32 4788187, %v216
    %v218 = vand.u32 2147483647, %v217
    %v220 = vcvt.s32.f32 %v213
    %v221 = vmul.f32 %v220, %v218
    %v222 = vxor.u32 %v221, 2147483648
    %v223 = vsel %vm140, %v222, %v221
    %v224 = vsub.s32 4, %v200
    %v225 = vsel %vm140, %v224, %v200
    %v226 = vsel %vm139, %v34, %v223
    %v227 = vsel %vm139, 0, %v225
    %v228 = vcosq.f32.pop %v226
    %v229 = vsinq.f32.pop %v226
    %vm230 = vweird.f32 %v34
    %v231 = vand.u32 %v227, 3
    %vm232 = vcmp.lt.s32.totalorder %v231, 2
    %vm233 = vcmp.eq.s32.totalorder %v231, 0
    %v234 = vxor.u32 %v229, 2147483648
    %v235 = vsel %vm233, %v228, %v234
    %vm236 = vcmp.eq.s32.totalorder %v231, 2
    %v237 = vxor.u32 %v228, 2147483648
    %v238 = vsel %vm236, %v237, %v229
    %v239 = vsel %vm232, %v235, %v238
    %v240 = vsel %vm230, nan, %v239
    %241 = vst [vmem:[#allocation2] sm:$0xff] %v137
    %242 = vst [vmem:[#allocation2 + $0x10] sm:$0xff] %v240
    %v243 = vand.u32 2147483647, %v33
    %vm244 = vcmp.le.f32.partialorder %v243, 0.7853982
    %vm245 = vcmp.lt.s32.totalorder %v33, 0
    %v246 = vand.u32 %v33, 2139095040
    %v247 = vshrl.u32 %v246, 23
    %v248 = vsub.s32 %v247, 127
    %v249 = vand.u32 2147483647, %v33
    %v250 = vand.u32 %v249, 8388607
    %v251 = vor.u32 %v250, 8388608
    %v252 = vsub.s32 0, %v251
    %v253 = vadd.s32 %v248, 1
    %vm254 = vcmp.gt.s32.totalorder %v253, 0
    %v255 = vsel %vm254, %v253, 0
    %v256 = vshrl.u32 %v255, 5
    %v257 = vand.u32 %v255, 31
    %v258 = vsub.s32 32, %v257
    %v259 = vshrl.u32 683565275, %v258
    %v260 = vshll.u32 683565275, %v257
    %v261 = vshrl.u32 2475754826, %v258
    %v262 = vor.u32 %v260, %v261
    %v263 = vshll.u32 2475754826, %v257
    %v264 = vshrl.u32 2131351028, %v258
    %v265 = vor.u32 %v263, %v264
    %v266 = vshll.u32 2131351028, %v257
    %v267 = vshrl.u32 2102212464, %v258
    %v268 = vor.u32 %v266, %v267
    %v269 = vshll.u32 2102212464, %v257
    %v270 = vshrl.u32 920167782, %v258
    %v271 = vor.u32 %v269, %v270
    %v272 = vshll.u32 920167782, %v257
    %v273 = vshrl.u32 1326507024, %v258
    %v274 = vor.u32 %v272, %v273
    %vm275 = vcmp.lt.s32.totalorder %v256, 1
    %vm276 = vcmp.lt.s32.totalorder %v256, 2
    %vm277 = vcmp.lt.s32.totalorder %v256, 3
    %vm278 = vcmp.lt.s32.totalorder %v256, 4
    %v279 = vsel %vm275, %v259, %v262
    %v280 = vsel %vm278, %v268, 2102212464
    %v281 = vsel %vm277, %v265, %v280
    %v282 = vsel %vm276, %v279, %v281
    %v283 = vsel %vm275, %v262, %v265
    %v284 = vsel %vm278, %v271, 920167782
    %v285 = vsel %vm277, %v268, %v284
    %v286 = vsel %vm276, %v283, %v285
    %v287 = vsel %vm275, %v265, %v268
    %v288 = vsel %vm278, %v274, 1326507024
    %v289 = vsel %vm277, %v271, %v288
    %v290 = vsel %vm276, %v287, %v289
    %v291 = vshll.u32 %v251, 8
    %v292 = vmul.u32.u64.compose %v291, %v290
    %v293 = vextract.low.u32 %v292
    %v294 = vextract.high.u32 %v292
    %v295 = vmul.u32.u64.compose %v291, %v286
    %v296 = vextract.low.u32 %v295
    %v297 = vextract.high.u32 %v295
    %v298 = vmul.u32 %v291, %v282
    %v299 = vadd.s32 %v294, %v296
    %vm300 = vc.u32 %v294, %v296
    %v301 = vadd.s32 %v297, 1
    %v302 = vsel %vm300, %v301, %v297
    %v303 = vadd.s32 %v298, %v302
    %v304 = vadd.s32 %v303, 536870912
    %v305 = vshrl.u32 %v304, 30
    %v306 = vshll.u32 %v305, 30
    %v307 = vsub.s32 %v303, %v306
    %vm308 = vcmp.lt.s32.totalorder %v307, 0
    %v309 = vsub.s32 0, %v307
    %v310 = vsel %vm308, %v309, %v307
    %v311 = vclz %v310
    %v312 = vsub.s32 %v311, 2
    %vm313 = vcmp.gt.s32.totalorder 0, %v312
    %v314 = vsel %vm313, 0, %v312
    %v315 = vsub.s32 32, %v314
    %v316 = vshll.u32 %v307, %v314
    %v317 = vshrl.u32 %v299, %v315
    %v318 = vor.u32 %v316, %v317
    %v319 = vsub.s32 4294967266, %v314
    %v320 = vadd.s32 %v319, 127
    %v321 = vshll.u32 %v320, 23
    %v322 = vor.u32 4788187, %v321
    %v323 = vand.u32 2147483647, %v322
    %v325 = vcvt.s32.f32 %v318
    %v326 = vmul.f32 %v325, %v323
    %v327 = vxor.u32 %v326, 2147483648
    %v328 = vsel %vm245, %v327, %v326
    %v329 = vsub.s32 4, %v305
    %v330 = vsel %vm245, %v329, %v305
    %v331 = vsel %vm244, %v33, %v328
    %v332 = vsel %vm244, 0, %v330
    %v333 = vcosq.f32.pop %v331
    %v334 = vsinq.f32.pop %v331
    %vm335 = vweird.f32 %v33
    %v336 = vadd.s32 %v332, 3
    %v337 = vand.u32 %v336, 3
    %vm338 = vcmp.lt.s32.totalorder %v337, 2
    %vm339 = vcmp.eq.s32.totalorder %v337, 0
    %v340 = vxor.u32 %v334, 2147483648
    %v341 = vsel %vm339, %v333, %v340
    %vm342 = vcmp.eq.s32.totalorder %v337, 2
    %v343 = vxor.u32 %v333, 2147483648
    %v344 = vsel %vm342, %v343, %v334
    %v345 = vsel %vm338, %v341, %v344
    %v346 = vsel %vm335, nan, %v345
    %v347 = vand.u32 2147483647, %v34
    %vm348 = vcmp.le.f32.partialorder %v347, 0.7853982
    %vm349 = vcmp.lt.s32.totalorder %v34, 0
    %v350 = vand.u32 %v34, 2139095040
    %v351 = vshrl.u32 %v350, 23
    %v352 = vsub.s32 %v351, 127
    %v353 = vand.u32 2147483647, %v34
    %v354 = vand.u32 %v353, 8388607
    %v355 = vor.u32 %v354, 8388608
    %v356 = vsub.s32 0, %v355
    %v357 = vadd.s32 %v352, 1
    %vm358 = vcmp.gt.s32.totalorder %v357, 0
    %v359 = vsel %vm358, %v357, 0
    %v360 = vshrl.u32 %v359, 5
    %v361 = vand.u32 %v359, 31
    %v362 = vsub.s32 32, %v361
    %v363 = vshrl.u32 683565275, %v362
    %v364 = vshll.u32 683565275, %v361
    %v365 = vshrl.u32 2475754826, %v362
    %v366 = vor.u32 %v364, %v365
    %v367 = vshll.u32 2475754826, %v361
    %v368 = vshrl.u32 2131351028, %v362
    %v369 = vor.u32 %v367, %v368
    %v370 = vshll.u32 2131351028, %v361
    %v371 = vshrl.u32 2102212464, %v362
    %v372 = vor.u32 %v370, %v371
    %v373 = vshll.u32 2102212464, %v361
    %v374 = vshrl.u32 920167782, %v362
    %v375 = vor.u32 %v373, %v374
    %v376 = vshll.u32 920167782, %v361
    %v377 = vshrl.u32 1326507024, %v362
    %v378 = vor.u32 %v376, %v377
    %vm379 = vcmp.lt.s32.totalorder %v360, 1
    %vm380 = vcmp.lt.s32.totalorder %v360, 2
    %vm381 = vcmp.lt.s32.totalorder %v360, 3
    %vm382 = vcmp.lt.s32.totalorder %v360, 4
    %v383 = vsel %vm379, %v363, %v366
    %v384 = vsel %vm382, %v372, 2102212464
    %v385 = vsel %vm381, %v369, %v384
    %v386 = vsel %vm380, %v383, %v385
    %v387 = vsel %vm379, %v366, %v369
    %v388 = vsel %vm382, %v375, 920167782
    %v389 = vsel %vm381, %v372, %v388
    %v390 = vsel %vm380, %v387, %v389
    %v391 = vsel %vm379, %v369, %v372
    %v392 = vsel %vm382, %v378, 1326507024
    %v393 = vsel %vm381, %v375, %v392
    %v394 = vsel %vm380, %v391, %v393
    %v395 = vshll.u32 %v355, 8
    %v396 = vmul.u32.u64.compose %v395, %v394
    %v397 = vextract.low.u32 %v396
    %v398 = vextract.high.u32 %v396
    %v399 = vmul.u32.u64.compose %v395, %v390
    %v400 = vextract.low.u32 %v399
    %v401 = vextract.high.u32 %v399
    %v402 = vmul.u32 %v395, %v386
    %v403 = vadd.s32 %v398, %v400
    %vm404 = vc.u32 %v398, %v400
    %v405 = vadd.s32 %v401, 1
    %v406 = vsel %vm404, %v405, %v401
    %v407 = vadd.s32 %v402, %v406
    %v408 = vadd.s32 %v407, 536870912
    %v409 = vshrl.u32 %v408, 30
    %v410 = vshll.u32 %v409, 30
    %v411 = vsub.s32 %v407, %v410
    %vm412 = vcmp.lt.s32.totalorder %v411, 0
    %v413 = vsub.s32 0, %v411
    %v414 = vsel %vm412, %v413, %v411
    %v415 = vclz %v414
    %v416 = vsub.s32 %v415, 2
    %vm417 = vcmp.gt.s32.totalorder 0, %v416
    %v418 = vsel %vm417, 0, %v416
    %v419 = vsub.s32 32, %v418
    %v420 = vshll.u32 %v411, %v418
    %v421 = vshrl.u32 %v403, %v419
    %v422 = vor.u32 %v420, %v421
    %v423 = vsub.s32 4294967266, %v418
    %v424 = vadd.s32 %v423, 127
    %v425 = vshll.u32 %v424, 23
    %v426 = vor.u32 4788187, %v425
    %v427 = vand.u32 2147483647, %v426
    %v429 = vcvt.s32.f32 %v422
    %v430 = vmul.f32 %v429, %v427
    %v431 = vxor.u32 %v430, 2147483648
    %v432 = vsel %vm349, %v431, %v430
    %v433 = vsub.s32 4, %v409
    %v434 = vsel %vm349, %v433, %v409
    %v435 = vsel %vm348, %v34, %v432
    %v436 = vsel %vm348, 0, %v434
    %v437 = vcosq.f32.pop %v435
    %v438 = vsinq.f32.pop %v435
    %vm439 = vweird.f32 %v34
    %v440 = vadd.s32 %v436, 3
    %v441 = vand.u32 %v440, 3
    %vm442 = vcmp.lt.s32.totalorder %v441, 2
    %vm443 = vcmp.eq.s32.totalorder %v441, 0
    %v444 = vxor.u32 %v438, 2147483648
    %v445 = vsel %vm443, %v437, %v444
    %vm446 = vcmp.eq.s32.totalorder %v441, 2
    %v447 = vxor.u32 %v437, 2147483648
    %v448 = vsel %vm446, %v447, %v438
    %v449 = vsel %vm442, %v445, %v448
    %v450 = vsel %vm439, nan, %v449
    %451 = vst [vmem:[#allocation2 + $0x8] sm:$0xff] %v346
    %452 = vst [vmem:[#allocation2 + $0x18] sm:$0xff] %v450
    // Predicated region
    $region10: #{tpu_custom_call.1} parent=1 // pred_check
      _
    $region11: #{tpu_custom_call.1} parent=1 // pred_check_branch
      %454 = sbr.rel (0) target = $region13
    $region12: #{tpu_custom_call.1} parent=1 // pred_region
      %s456 = ssub.s32 512, 512
      %457 = vsyncadd [#allocation3], %s456
      %s458 = sshll.u32 [#allocation2], 4
      %s459 = int_to_ptr.vmem [resolvable:$true] %s458
      %464 = dma.vmem_to_hbm [thread:$0]  %s459, 512, %s2, [#allocation3], 256, 256, 16
    $region13: #{tpu_custom_call.1} parent=1 // pred_fallthru
      _
    // Predicated region
    $region14: #{tpu_custom_call.1} parent=1 // pred_check
      _
    $region15: #{tpu_custom_call.1} parent=1 // pred_check_branch
      %466 = sbr.rel (0) target = $region17
    $region16: #{tpu_custom_call.1} parent=1 // pred_region
      %467 = dma.done [#allocation3], 512
    $region17: #{tpu_custom_call.1} parent=1 // pred_fallthru
      _
    %468 = vsyncpa [#allocation3], 1

</llo_original>
